<compile_context>
chip_gen: v6e
topology: v6e:2x2x1
jax: 0.10.0
libtpu: 0.0.40
codegen_flags: <defaults>
</compile_context>

<pallas_src>
import jax
import jax.numpy as jnp
from jax.experimental import pallas as pl
from jax.experimental.pallas import tpu as pltpu

EPS = 1e-5
LANE = 128

_CPARAMS = pltpu.CompilerParams(
    dimension_semantics=("parallel",),
    vmem_limit_bytes=48 * 1024 * 1024,   # safe on v7x (64 MiB) and v5e/v6e (128 MiB)
)


# ----------------------------- in-kernel helpers ---------------------------

def _conv3x3_im2col(a_bf16, w_ref):
    """3x3 'same' conv of a (Hs, Ws, Cin) bf16 tile against w_ref (3, 3*Cin, Cp).

    The three W-direction taps are merged into one (Hs+2, Ws, 3*Cin) slab
    (zero rows at the H borders), so the conv is 3 full-tile bf16 MXU matmuls
    with K = 3*Cin and f32 accumulation. The per-kh taps are static row slices
    of the single padded slab (no per-tap shifted copies).
    """
    hs, ws, cin = a_bf16.shape
    k = 3 * cin
    m = hs * ws

    zrow = jnp.zeros((1, ws, cin), jnp.bfloat16)
    ap = jnp.concatenate([zrow, a_bf16, zrow], axis=0)            # (hs+2, ws, cin)
    zcol = jnp.zeros((hs + 2, 1, cin), jnp.bfloat16)
    slab = jnp.concatenate(
        [
            jnp.concatenate([zcol, ap[:, : ws - 1, :]], axis=1),  # kw=0 (dw=-1)
            ap,                                                   # kw=1 (dw= 0)
            jnp.concatenate([ap[:, 1:, :], zcol], axis=1),        # kw=2 (dw=+1)
        ],
        axis=-1,
    )                                                             # (hs+2, ws, 3*cin)

    # kh-th tap rows: slab[kh : kh+hs]  <=>  input rows shifted by dh = kh-1.
    t0 = slab[0:hs].reshape(m, k)
    t1 = slab[1:hs + 1].reshape(m, k)
    t2 = slab[2:hs + 2].reshape(m, k)
    acc = jnp.dot(t0, w_ref[0], preferred_element_type=jnp.float32)
    acc = acc + jnp.dot(t1, w_ref[1], preferred_element_type=jnp.float32)
    acc = acc + jnp.dot(t2, w_ref[2], preferred_element_type=jnp.float32)
    return acc                                                    # (m, Cp) f32


def _emit_out_and_stats(acc, hs, ws, o_ref, st_ref):
    o_ref[0] = acc.reshape(hs, ws, -1).astype(o_ref.dtype)
    s = jnp.sum(acc, axis=0, keepdims=True)            # (1, Cp)
    ss = jnp.sum(acc * acc, axis=0, keepdims=True)     # (1, Cp)
    st_ref[0] = jnp.concatenate([s, ss], axis=0)       # (2, Cp) f32


# ------------------------------- kernels ------------------------------------

def _pool_conv_stats_kernel(x_ref, w_ref, y_ref, st_ref):
    # x_ref : (1, Hh, 2, Wh, 2*Cin)  image reshaped so the 2x2 pool corners are
    #                                reachable with static indexing
    # w_ref : (3, 3*Cin, Cp) bf16    conv1 weights, im2col-packed, Cout padded
    # y_ref : (1, Hh, Wh, Cp) bf16   raw conv1 output (pre-BN), lane-dense
    # st_ref: (1, 2, Cp) f32         per-image [sum, sum_of_squares] over (H,W)
    cin = x_ref.shape[-1] // 2
    # fused MaxPool2d(2): max over H-corners (dim 2), then over the W-corners
    # packed pairwise into the last dim.
    mh = jnp.maximum(x_ref[0, :, 0], x_ref[0, :, 1])          # (Hh, Wh, 2*Cin)
    pooled = jnp.maximum(mh[..., :cin], mh[..., cin:])        # (Hh, Wh, Cin)
    acc = _conv3x3_im2col(pooled.astype(jnp.bfloat16), w_ref)
    _emit_out_and_stats(acc, pooled.shape[0], pooled.shape[1], y_ref, st_ref)


def _bn_relu_conv_stats_kernel(y_ref, sc_ref, w_ref, o_ref, st_ref):
    # y_ref : (1, Hh, Wh, Cp) bf16  raw conv1 output
    # sc_ref: (2, Cp) f32  row 0 = gamma/sqrt(var+eps), row 1 = beta - mean*row0
    # w_ref : (3, 3*Cp, Cp) bf16  conv2 weights, im2col-packed (K = 3*Cp)
    a = y_ref[0].astype(jnp.float32)
    a = jnp.maximum(a * sc_ref[0:1, :] + sc_ref[1:2, :], 0.0)  # fused BN1+ReLU
    acc = _conv3x3_im2col(a.astype(jnp.bfloat16), w_ref)
    _emit_out_and_stats(acc, a.shape[0], a.shape[1], o_ref, st_ref)


def _bn_relu_kernel(y_ref, sc_ref, o_ref):
    y = y_ref[0].astype(jnp.float32)
    o_ref[0] = jnp.maximum(
        y * sc_ref[0:1, :] + sc_ref[1:2, :], 0.0).astype(o_ref.dtype)


# ------------------------------- wrappers ------------------------------------

def _round_up(x, m):
    return (x + m - 1) // m * m


def _pack_conv_weights(w_hwio, cin_pad, cout_pad):
    """(3,3,Cin,Cout) HWIO -> (3, 3*Cin_pad, Cout_pad) bf16, im2col-packed.

    Middle axis index = kw*Cin_pad + ci, matching the W-shift slab channel order.
    """
    kh, kw, cin, cout = w_hwio.shape
    w = jnp.zeros((kh, kw, cin_pad, cout_pad), jnp.float32)
    w = w.at[:, :, :cin, :cout].set(w_hwio.astype(jnp.float32))
    return w.reshape(kh, kw * cin_pad, cout_pad).astype(jnp.bfloat16)


def _pad_channels(v, n, fill):
    c = v.shape[0]
    v = v.astype(jnp.float32)
    if c == n:
        return v
    return jnp.concatenate([v, jnp.full((n - c,), fill, jnp.float32)])


def _bn_scale_shift(stats, gamma, beta, count):
    # stats: (N, 2, Cp) per-image [sum, sumsq]. Biased batch variance, as used
    # by PyTorch BatchNorm2d training-mode normalization.
    s = jnp.sum(stats[:, 0, :], axis=0)
    ss = jnp.sum(stats[:, 1, :], axis=0)
    mean = s / count
    var = jnp.maximum(ss / count - mean * mean, 0.0)
    inv = gamma * jax.lax.rsqrt(var + EPS)
    return jnp.stack([inv, beta - mean * inv], axis=0)       # (2, Cp) f32


def down_conv_forward(x_nchw, params):
    n, cin, h, w = x_nchw.shape
    assert h % 2 == 0 and w % 2 == 0, "MaxPool2d(2) assumes even spatial dims"
    hh, wh = h // 2, w // 2
    cout = params["w1"].shape[-1]
    cp = _round_up(cout, LANE)
    count = float(n * hh * wh)

    # NCHW -> NHWC once (channels on lanes); the extra reshape is metadata-only
    # and exposes the 2x2 pool corners to the kernel (no XLA corner gathers).
    x = jnp.transpose(x_nchw, (0, 2, 3, 1)).astype(jnp.float32)
    xr = x.reshape(n, hh, 2, wh, 2 * cin)

    w1p = _pack_conv_weights(params["w1"], cin, cp)   # (3, 3*Cin, Cp) bf16
    w2p = _pack_conv_weights(params["w2"], cp, cp)    # (3, 3*Cp,  Cp) bf16
    g1 = _pad_channels(params["g1"], cp, 1.0)
    b1 = _pad_channels(params["bb1"], cp, 0.0)
    g2 = _pad_channels(params["g2"], cp, 1.0)
    b2 = _pad_channels(params["bb2"], cp, 0.0)
    # Conv biases (params["b1"]/["b2"]) are NOT applied: training-mode BN's mean
    # subtraction cancels a per-channel constant bias exactly.

    # ---- pass A: fused maxpool + conv1 + BN1 partial stats -----------------
    y1, st1 = pl.pallas_call(
        _pool_conv_stats_kernel,
        out_shape=(jax.ShapeDtypeStruct((n, hh, wh, cp), jnp.bfloat16),
                   jax.ShapeDtypeStruct((n, 2, cp), jnp.float32)),
        grid=(n,),
        in_specs=[
            pl.BlockSpec((1, hh, 2, wh, 2 * cin), lambda i: (i, 0, 0, 0, 0)),
            pl.BlockSpec((3, 3 * cin, cp), lambda i: (0, 0, 0)),
        ],
        out_specs=(
            pl.BlockSpec((1, hh, wh, cp), lambda i: (i, 0, 0, 0)),
            pl.BlockSpec((1, 2, cp), lambda i: (i, 0, 0)),
        ),
        compiler_params=_CPARAMS,
    )(xr, w1p)

    sc1 = _bn_scale_shift(st1, g1, b1, count)   # tiny (2, Cp) XLA-side math

    # ---- pass B: fused BN1+ReLU (input path) + conv2 + BN2 partial stats ----
    y2, st2 = pl.pallas_call(
        _bn_relu_conv_stats_kernel,
        out_shape=(jax.ShapeDtypeStruct((n, hh, wh, cp), jnp.bfloat16),
                   jax.ShapeDtypeStruct((n, 2, cp), jnp.float32)),
        grid=(n,),
        in_specs=[
            pl.BlockSpec((1, hh, wh, cp), lambda i: (i, 0, 0, 0)),
            pl.BlockSpec((2, cp), lambda i: (0, 0)),
            pl.BlockSpec((3, 3 * cp, cp), lambda i: (0, 0, 0)),
        ],
        out_specs=(
            pl.BlockSpec((1, hh, wh, cp), lambda i: (i, 0, 0, 0)),
            pl.BlockSpec((1, 2, cp), lambda i: (i, 0, 0)),
        ),
        compiler_params=_CPARAMS,
    )(y1, sc1, w2p)

    sc2 = _bn_scale_shift(st2, g2, b2, count)

    # ---- pass C: BN2 + ReLU epilogue ---------------------------------------
    out = pl.pallas_call(
        _bn_relu_kernel,
        out_shape=jax.ShapeDtypeStruct((n, hh, wh, cp), jnp.float32),
        grid=(n,),
        in_specs=[
            pl.BlockSpec((1, hh, wh, cp), lambda i: (i, 0, 0, 0)),
            pl.BlockSpec((2, cp), lambda i: (0, 0)),
        ],
        out_specs=pl.BlockSpec((1, hh, wh, cp), lambda i: (i, 0, 0, 0)),
        compiler_params=_CPARAMS,
    )(y2, sc2)
    # TODO(synk): BatchNorm running_mean/running_var buffer updates are stateful
    # training-time side effects with no influence on this forward output.

    out = out[..., :cout]                         # drop channel padding
    return jnp.transpose(out, (0, 3, 1, 2))       # NHWC -> NCHW


def init_params(key, cin, cout):
    ks = jax.random.split(key, 4)
    return dict(
        w1=0.1 * jax.random.normal(ks[0], (3, 3, cin, cout), jnp.float32),
        b1=0.05 * jax.random.normal(ks[1], (cout,), jnp.float32),   # cancelled by BN
        w2=0.1 * jax.random.normal(ks[2], (3, 3, cout, cout), jnp.float32),
        b2=0.05 * jax.random.normal(ks[3], (cout,), jnp.float32),   # cancelled by BN
        g1=jnp.ones((cout,), jnp.float32),    # BatchNorm2d default weight
        bb1=jnp.zeros((cout,), jnp.float32),  # BatchNorm2d default bias
        g2=jnp.ones((cout,), jnp.float32),
        bb2=jnp.zeros((cout,), jnp.float32),
    )


def _reference(x_nchw, params):
    # Pure-JAX reference (same math as the PyTorch module, training-mode BN).
    x = jnp.transpose(x_nchw, (0, 2, 3, 1))
    n, h, w, cin = x.shape
    x = x.reshape(n, h // 2, 2, w // 2, 2, cin).max(axis=(2, 4))

    def conv_bn_relu(t, wgt, g, b):
        y = jax.lax.conv_general_dilated(
            t, wgt, window_strides=(1, 1), padding="SAME",
            dimension_numbers=("NHWC", "HWIO", "NHWC"),
            precision=jax.lax.Precision.HIGHEST)
        mean = jnp.mean(y, axis=(0, 1, 2))
        var = jnp.mean((y - mean) ** 2, axis=(0, 1, 2))
        return jnp.maximum((y - mean) * jax.lax.rsqrt(var + EPS) * g + b, 0.0)

    x = conv_bn_relu(x, params["w1"], params["g1"], params["bb1"])
    x = conv_bn_relu(x, params["w2"], params["g2"], params["bb2"])
    return jnp.transpose(x, (0, 3, 1, 2))


if __name__ == "__main__":
    key = jax.random.PRNGKey(0)
    kx, kp = jax.random.split(key)
    n, cin, h, w = 2, 4, 16, 16
    cout = 8
    x = jax.random.normal(kx, (n, cin, h, w), jnp.float32)
    params = init_params(kp, cin, cout)

    out = jax.block_until_ready(down_conv_forward(x, params))
    assert out.shape == (n, cout, h // 2, w // 2), out.shape
    assert bool(jnp.all(jnp.isfinite(out)))

    ref = jax.block_until_ready(_reference(x, params))
    max_err = float(jnp.max(jnp.abs(out - ref)))
    assert bool(jnp.allclose(out, ref, atol=2e-2, rtol=2e-2)), max_err
    print("KERNEL_OK")
</pallas_src>

<mosaic_0001>
module attributes {stable_mosaic.version = 11 : i64} {
  func.func @_pool_conv_stats_kernel(%arg0: i32, %arg1: memref<1x8x2x8x8xf32, #tpu.memory_space<vmem>>, %arg2: memref<3x12x128xbf16, #tpu.memory_space<vmem>>, %arg3: memref<1x8x8x128xbf16, #tpu.memory_space<vmem>>, %arg4: memref<1x2x128xf32, #tpu.memory_space<vmem>>) attributes {dimension_semantics = [#tpu.dimension_semantics<parallel>], iteration_bounds = array<i64: 2>, scalar_prefetch = 0 : i64, scratch_operands = 0 : i64, tpu.core_type = #tpu.core_type<tc>, window_params = [{transform_indices = @transform_0, window_bounds = array<i64: 1, 8, 2, 8, 8>}, {pipeline_mode = #tpu.pipeline_mode<synchronous>, transform_indices = @transform_1, window_bounds = array<i64: 3, 12, 128>}, {transform_indices = @transform_2, window_bounds = array<i64: 1, 8, 8, 128>}, {transform_indices = @transform_3, window_bounds = array<i64: 1, 2, 128>}]} {
    %c0 = arith.constant 0 : index
    %c0_0 = arith.constant 0 : index
    %c0_1 = arith.constant 0 : index
    %c0_2 = arith.constant 0 : index
    %c0_3 = arith.constant 0 : index
    %0 = vector.load %arg1[%c0, %c0_0, %c0_1, %c0_2, %c0_3] : memref<1x8x2x8x8xf32, #tpu.memory_space<vmem>>, vector<1x8x1x8x8xf32>
    %1 = vector.shape_cast %0 : vector<1x8x1x8x8xf32> to vector<8x8x8xf32>
    %c0_4 = arith.constant 0 : index
    %c0_5 = arith.constant 0 : index
    %c1 = arith.constant 1 : index
    %c0_6 = arith.constant 0 : index
    %c0_7 = arith.constant 0 : index
    %2 = vector.load %arg1[%c0_4, %c0_5, %c1, %c0_6, %c0_7] : memref<1x8x2x8x8xf32, #tpu.memory_space<vmem>>, vector<1x8x1x8x8xf32>
    %3 = vector.shape_cast %2 : vector<1x8x1x8x8xf32> to vector<8x8x8xf32>
    %4 = arith.maximumf %1, %3 : vector<8x8x8xf32>
    %5 = vector.extract_strided_slice %4 {offsets = [0, 0, 0], sizes = [8, 8, 4], strides = [1, 1, 1]} : vector<8x8x8xf32> to vector<8x8x4xf32>
    %6 = vector.extract_strided_slice %4 {offsets = [0, 0, 4], sizes = [8, 8, 4], strides = [1, 1, 1]} : vector<8x8x8xf32> to vector<8x8x4xf32>
    %7 = arith.maximumf %5, %6 : vector<8x8x4xf32>
    %8 = arith.truncf %7 : vector<8x8x4xf32> to vector<8x8x4xbf16>
    %cst = arith.constant 0.000000e+00 : bf16
    %9 = vector.broadcast %cst : bf16 to vector<1x8x4xbf16>
    %10 = tpu.concatenate %9, %8, %9 in 0 : vector<1x8x4xbf16>, vector<8x8x4xbf16>, vector<1x8x4xbf16> -> vector<10x8x4xbf16>
    %cst_8 = arith.constant 0.000000e+00 : bf16
    %11 = vector.broadcast %cst_8 : bf16 to vector<10x1x4xbf16>
    %12 = vector.extract_strided_slice %10 {offsets = [0, 0, 0], sizes = [10, 7, 4], strides = [1, 1, 1]} : vector<10x8x4xbf16> to vector<10x7x4xbf16>
    %13 = tpu.concatenate %11, %12 in 1 : vector<10x1x4xbf16>, vector<10x7x4xbf16> -> vector<10x8x4xbf16>
    %14 = vector.extract_strided_slice %10 {offsets = [0, 1, 0], sizes = [10, 7, 4], strides = [1, 1, 1]} : vector<10x8x4xbf16> to vector<10x7x4xbf16>
    %15 = tpu.concatenate %14, %11 in 1 : vector<10x7x4xbf16>, vector<10x1x4xbf16> -> vector<10x8x4xbf16>
    %16 = tpu.concatenate %13, %10, %15 in 2 : vector<10x8x4xbf16>, vector<10x8x4xbf16>, vector<10x8x4xbf16> -> vector<10x8x12xbf16>
    %17 = vector.extract_strided_slice %16 {offsets = [0, 0, 0], sizes = [8, 8, 12], strides = [1, 1, 1]} : vector<10x8x12xbf16> to vector<8x8x12xbf16>
    %18 = vector.shape_cast %17 : vector<8x8x12xbf16> to vector<64x12xbf16>
    %19 = vector.extract_strided_slice %16 {offsets = [1, 0, 0], sizes = [8, 8, 12], strides = [1, 1, 1]} : vector<10x8x12xbf16> to vector<8x8x12xbf16>
    %20 = vector.shape_cast %19 : vector<8x8x12xbf16> to vector<64x12xbf16>
    %21 = vector.extract_strided_slice %16 {offsets = [2, 0, 0], sizes = [8, 8, 12], strides = [1, 1, 1]} : vector<10x8x12xbf16> to vector<8x8x12xbf16>
    %22 = vector.shape_cast %21 : vector<8x8x12xbf16> to vector<64x12xbf16>
    %c0_9 = arith.constant 0 : index
    %c0_10 = arith.constant 0 : index
    %c0_11 = arith.constant 0 : index
    %23 = vector.load %arg2[%c0_9, %c0_10, %c0_11] : memref<3x12x128xbf16, #tpu.memory_space<vmem>>, vector<1x12x128xbf16>
    %24 = vector.shape_cast %23 : vector<1x12x128xbf16> to vector<12x128xbf16>
    %cst_12 = arith.constant dense<0.000000e+00> : vector<64x128xf32>
    %25 = tpu.matmul %18, %24, %cst_12 {dimension_numbers = #tpu.dot_dimension_numbers<[1], [0], [0], [1], [0, 0, 1, 1], [], []>} : vector<64x12xbf16>, vector<12x128xbf16>, vector<64x128xf32> -> vector<64x128xf32>
    %c1_13 = arith.constant 1 : index
    %c0_14 = arith.constant 0 : index
    %c0_15 = arith.constant 0 : index
    %26 = vector.load %arg2[%c1_13, %c0_14, %c0_15] : memref<3x12x128xbf16, #tpu.memory_space<vmem>>, vector<1x12x128xbf16>
    %27 = vector.shape_cast %26 : vector<1x12x128xbf16> to vector<12x128xbf16>
    %cst_16 = arith.constant dense<0.000000e+00> : vector<64x128xf32>
    %28 = tpu.matmul %20, %27, %cst_16 {dimension_numbers = #tpu.dot_dimension_numbers<[1], [0], [0], [1], [0, 0, 1, 1], [], []>} : vector<64x12xbf16>, vector<12x128xbf16>, vector<64x128xf32> -> vector<64x128xf32>
    %29 = arith.addf %25, %28 : vector<64x128xf32>
    %c2 = arith.constant 2 : index
    %c0_17 = arith.constant 0 : index
    %c0_18 = arith.constant 0 : index
    %30 = vector.load %arg2[%c2, %c0_17, %c0_18] : memref<3x12x128xbf16, #tpu.memory_space<vmem>>, vector<1x12x128xbf16>
    %31 = vector.shape_cast %30 : vector<1x12x128xbf16> to vector<12x128xbf16>
    %cst_19 = arith.constant dense<0.000000e+00> : vector<64x128xf32>
    %32 = tpu.matmul %22, %31, %cst_19 {dimension_numbers = #tpu.dot_dimension_numbers<[1], [0], [0], [1], [0, 0, 1, 1], [], []>} : vector<64x12xbf16>, vector<12x128xbf16>, vector<64x128xf32> -> vector<64x128xf32>
    %33 = arith.addf %29, %32 : vector<64x128xf32>
    %34 = vector.shape_cast %33 : vector<64x128xf32> to vector<8x8x128xf32>
    %35 = arith.truncf %34 : vector<8x8x128xf32> to vector<8x8x128xbf16>
    %c0_20 = arith.constant 0 : index
    %c0_21 = arith.constant 0 : index
    %c0_22 = arith.constant 0 : index
    %c0_23 = arith.constant 0 : index
    %36 = vector.load %arg3[%c0_20, %c0_21, %c0_22, %c0_23] : memref<1x8x8x128xbf16, #tpu.memory_space<vmem>>, vector<1x8x8x128xbf16>
    %37 = vector.shape_cast %36 : vector<1x8x8x128xbf16> to vector<8x8x128xbf16>
    %38 = vector.shape_cast %35 : vector<8x8x128xbf16> to vector<1x8x8x128xbf16>
    tpu.vector_store %arg3[%c0_20, %c0_21, %c0_22, %c0_23], %38 {strides = array<i32>} : memref<1x8x8x128xbf16, #tpu.memory_space<vmem>>, vector<1x8x8x128xbf16>,
    %cst_24 = arith.constant dense<0.000000e+00> : vector<128xf32>
    %39 = vector.multi_reduction <add>, %33, %cst_24 [0] : vector<64x128xf32> to vector<128xf32>
    %40 = vector.shape_cast %39 : vector<128xf32> to vector<1x128xf32>
    %41 = arith.mulf %33, %33 : vector<64x128xf32>
    %cst_25 = arith.constant dense<0.000000e+00> : vector<128xf32>
    %42 = vector.multi_reduction <add>, %41, %cst_25 [0] : vector<64x128xf32> to vector<128xf32>
    %43 = vector.shape_cast %42 : vector<128xf32> to vector<1x128xf32>
    %44 = tpu.concatenate %40, %43 in 0 : vector<1x128xf32>, vector<1x128xf32> -> vector<2x128xf32>
    %c0_26 = arith.constant 0 : index
    %c0_27 = arith.constant 0 : index
    %c0_28 = arith.constant 0 : index
    %45 = vector.load %arg4[%c0_26, %c0_27, %c0_28] : memref<1x2x128xf32, #tpu.memory_space<vmem>>, vector<1x2x128xf32>
    %46 = vector.shape_cast %45 : vector<1x2x128xf32> to vector<2x128xf32>
    %47 = vector.shape_cast %44 : vector<2x128xf32> to vector<1x2x128xf32>
    tpu.vector_store %arg4[%c0_26, %c0_27, %c0_28], %47 {strides = array<i32>} : memref<1x2x128xf32, #tpu.memory_space<vmem>>, vector<1x2x128xf32>,
    return
  }
  func.func @transform_0(%arg0: i32) -> (i32, i32, i32, i32, i32) {
    %c0_i32 = arith.constant 0 : i32
    %c0_i32_0 = arith.constant 0 : i32
    %c0_i32_1 = arith.constant 0 : i32
    %c0_i32_2 = arith.constant 0 : i32
    %c0_i32_3 = arith.constant 0 : i32
    return %arg0, %c0_i32, %c0_i32_0, %c0_i32_1, %c0_i32_2 : i32, i32, i32, i32, i32
  }
  func.func @transform_1(%arg0: i32) -> (i32, i32, i32) {
    %c0_i32 = arith.constant 0 : i32
    %c0_i32_0 = arith.constant 0 : i32
    %c0_i32_1 = arith.constant 0 : i32
    %c0_i32_2 = arith.constant 0 : i32
    return %c0_i32, %c0_i32_0, %c0_i32_1 : i32, i32, i32
  }
  func.func @transform_2(%arg0: i32) -> (i32, i32, i32, i32) {
    %c0_i32 = arith.constant 0 : i32
    %c0_i32_0 = arith.constant 0 : i32
    %c0_i32_1 = arith.constant 0 : i32
    %c0_i32_2 = arith.constant 0 : i32
    return %arg0, %c0_i32, %c0_i32_0, %c0_i32_1 : i32, i32, i32, i32
  }
  func.func @transform_3(%arg0: i32) -> (i32, i32, i32) {
    %c0_i32 = arith.constant 0 : i32
    %c0_i32_0 = arith.constant 0 : i32
    %c0_i32_1 = arith.constant 0 : i32
    return %arg0, %c0_i32, %c0_i32_0 : i32, i32, i32
  }
}

</mosaic_0001>

<llo_original>
// kernel: tpu_custom_call.1
$region0: #{tpu_custom_call.1}
  #allocation0 [shape = 'u32[]', space=smem, size = 0x4, offset = 0x4, fixed_abs, tag = 'smem constant byte address 0x4 - core index']
  #allocation1 [shape = 'u32[144,128]{1,0:T(1,128)}', space=vmem, size = 0x12000, scoped, tag = 'internal scratch']
  %s0 = inlined_call_operand.hbm [shape: f32[2,8,2,8,8], index: 0, kind: input, shape index: {}]
  %s1 = inlined_call_operand.hbm [shape: bf16[3,12,128], index: 1, kind: input, shape index: {}]
  %s2 = inlined_call_operand.hbm [shape: bf16[2,8,8,128], index: 2, kind: output, shape index: {0}]
  %s3 = inlined_call_operand.hbm [shape: f32[2,2,128], index: 3, kind: output, shape index: {1}]
  %4 = xla_tuple %s2, %s3
  %s5 = sld [smem:[#allocation0]]
  $region57: #{tpu_custom_call.1} parent=0
    _
  %s7 = ssub.s32 1, %s5
  %s8 = scalar_select 0, %s7, %s5
  $region1: #{tpu_custom_call.1} parent=0
    #allocation2 [shape = 'u8[131072]{0}', space=vmem, size = 0x20000, scoped, tag = 'input window, operand 0']
    #allocation3 [shape = 's32[2]{0}', space=sflag, size = 0x8, scoped, tag = 'scoped memory for tpu_custom_call.1']
    #allocation4 [shape = 's32[2]{0}', space=sflag, size = 0x8, scoped, tag = 'scoped memory for tpu_custom_call.1']
    #allocation5 [shape = 'u8[12288]{0}', space=vmem, size = 0x3000, scoped, tag = 'input window, operand 1, single buffered']
    #allocation6 [shape = 's32[1]{0}', space=sflag, size = 0x4, scoped, tag = 'scoped memory for tpu_custom_call.1']
    #allocation7 [shape = 'u8[32768]{0}', space=vmem, size = 0x8000, scoped, tag = 'output window, operand 0']
    #allocation8 [shape = 'u8[2048]{0}', space=vmem, size = 0x800, scoped, tag = 'output window, operand 1']
    #allocation9 [shape = 's32[2]{0}', space=sflag, size = 0x8, scoped, tag = 'scoped memory for tpu_custom_call.1']
    %9 = vsyncpa [#allocation3], 0
    %s10 = scalar_lea.sflag [#allocation3], 1
    %11 = vsyncpa %s10, 0
    %12 = vsyncpa [#allocation6], 0
    %13 = vsyncpa [#allocation4], 0
    %s14 = scalar_lea.sflag [#allocation4], 1
    %15 = vsyncpa %s14, 0
    %16 = vsyncpa [#allocation9], 0
    %s17 = scalar_lea.sflag [#allocation9], 1
    %18 = vsyncpa %s17, 0
    loop: start=0, step=1, limit=4
    $region2: #{tpu_custom_call.1} parent=1 // loop_pre_header
      _
    $region3: #{tpu_custom_call.1} parent=1 // loop_header
      %s20 = sphi 0, %s24
      %p21 = scmp.ge.s32.totalorder %s20, 4
      %s30 = sphi 0, %s32
      %s33 = sphi 0, %s30
      %s34 = sphi 0, %s33
      %s50 = sphi 0, %s34
      %s54 = sphi 0, %s54
      %s56 = sphi 0, %s54
      %s57 = sphi 0, %s56
      %s71 = sphi 0, %s57
      %s77 = sphi 0, %s79
      %s80 = sphi 0, %s77
      %s81 = sphi 0, %s80
      %s97 = sphi 0, %s81
      %s103 = sphi 0, %s105
      %s106 = sphi 0, %s103
      %s107 = sphi 0, %s106
      %s123 = sphi 0, %s107
    $region4: #{tpu_custom_call.1} parent=1 // loop_header_branch
      %23 = sbr.rel (%p21) target = $region8
    $region5: #{tpu_custom_call.1} parent=1 // loop_body
      %s25 = ssub.s32 %s20, 1
      %s26 = ssub.s32 %s20, 2
      %s27 = sadd.s32 %s20, 1
      %s28 = ssub.s32 %s20, %s27
      %p29 = scmp.eq.s32.totalorder %s28, 0
      %s31 = sadd.s32 %s30, 1
      %s32 = scalar_select %p29, %s30, %s31
      %p35 = pneg %p29
      %p36 = scmp.eq.s32.totalorder %s20, 1
      %p37 = por %p35, %p36
      %p38 = scmp.ne.s32.totalorder %s30, %s33
      %p39 = scmp.eq.s32.totalorder %s20, 0
      %p40 = por %p38, %p39
      %p41 = scmp.ne.s32.totalorder %s30, %s33
      %p42 = scmp.eq.s32.totalorder %s25, 1
      %p43 = por %p41, %p42
      %p44 = scmp.ne.s32.totalorder %s33, %s34
      %p45 = scmp.eq.s32.totalorder %s25, 0
      %p46 = por %p44, %p45
      %p47 = scmp.ne.s32.totalorder %s33, %s34
      %p48 = scmp.eq.s32.totalorder %s26, 1
      %p49 = por %p47, %p48
      %p51 = scmp.ne.s32.totalorder %s34, %s50
      %p52 = scmp.eq.s32.totalorder %s26, 0
      %p53 = por %p51, %p52
      %s55 = sadd.s32 %s54, 1
      %p58 = scmp.eq.s32.totalorder %s20, 1
      %p59 = scmp.ne.s32.totalorder %s54, %s56
      %p60 = scmp.eq.s32.totalorder %s20, 0
      %p61 = por %p59, %p60
      %p62 = scmp.ne.s32.totalorder %s54, %s56
      %p63 = scmp.eq.s32.totalorder %s25, 1
      %p64 = por %p62, %p63
      %p65 = scmp.ne.s32.totalorder %s56, %s57
      %p66 = scmp.eq.s32.totalorder %s25, 0
      %p67 = por %p65, %p66
      %p68 = scmp.ne.s32.totalorder %s56, %s57
      %p69 = scmp.eq.s32.totalorder %s26, 1
      %p70 = por %p68, %p69
      %p72 = scmp.ne.s32.totalorder %s57, %s71
      %p73 = scmp.eq.s32.totalorder %s26, 0
      %p74 = por %p72, %p73
      %s75 = ssub.s32 %s20, %s27
      %p76 = scmp.eq.s32.totalorder %s75, 0
      %s78 = sadd.s32 %s77, 1
      %s79 = scalar_select %p76, %s77, %s78
      %p82 = pneg %p76
      %p83 = scmp.eq.s32.totalorder %s20, 1
      %p84 = por %p82, %p83
      %p85 = scmp.ne.s32.totalorder %s77, %s80
      %p86 = scmp.eq.s32.totalorder %s20, 0
      %p87 = por %p85, %p86
      %p88 = scmp.ne.s32.totalorder %s77, %s80
      %p89 = scmp.eq.s32.totalorder %s25, 1
      %p90 = por %p88, %p89
      %p91 = scmp.ne.s32.totalorder %s80, %s81
      %p92 = scmp.eq.s32.totalorder %s25, 0
      %p93 = por %p91, %p92
      %p94 = scmp.ne.s32.totalorder %s80, %s81
      %p95 = scmp.eq.s32.totalorder %s26, 1
      %p96 = por %p94, %p95
      %p98 = scmp.ne.s32.totalorder %s81, %s97
      %p99 = scmp.eq.s32.totalorder %s26, 0
      %p100 = por %p98, %p99
      %s101 = ssub.s32 %s20, %s27
      %p102 = scmp.eq.s32.totalorder %s101, 0
      %s104 = sadd.s32 %s103, 1
      %s105 = scalar_select %p102, %s103, %s104
      %p108 = pneg %p102
      %p109 = scmp.eq.s32.totalorder %s20, 1
      %p110 = por %p108, %p109
      %p111 = scmp.ne.s32.totalorder %s103, %s106
      %p112 = scmp.eq.s32.totalorder %s20, 0
      %p113 = por %p111, %p112
      %p114 = scmp.ne.s32.totalorder %s103, %s106
      %p115 = scmp.eq.s32.totalorder %s25, 1
      %p116 = por %p114, %p115
      %p117 = scmp.ne.s32.totalorder %s106, %s107
      %p118 = scmp.eq.s32.totalorder %s25, 0
      %p119 = por %p117, %p118
      %p120 = scmp.ne.s32.totalorder %s106, %s107
      %p121 = scmp.eq.s32.totalorder %s26, 1
      %p122 = por %p120, %p121
      %p124 = scmp.ne.s32.totalorder %s107, %s123
      %p125 = scmp.eq.s32.totalorder %s26, 0
      %p126 = por %p124, %p125
      %p127 = scmp.le.s32.totalorder 1, %s20
      %p128 = scmp.lt.s32.totalorder %s20, 3
      %p129 = pnand %p127, %p128
      %p130 = pneg %p129
      // Predicated region
      $region9: #{tpu_custom_call.1} parent=5 // pred_check
        _
      $region10: #{tpu_custom_call.1} parent=5 // pred_check_branch
        %132 = sbr.rel (%p129) target = $region12
      $region11: #{tpu_custom_call.1} parent=5 // pred_region
        %s133 = ssub.s32 %s20, 1
        // Predicated region
        $region13: #{tpu_custom_call.1} parent=11 // pred_check
          %p134 = pneg %p67
        $region14: #{tpu_custom_call.1} parent=11 // pred_check_branch
          %136 = sbr.rel (%p134) target = $region16
        $region15: #{tpu_custom_call.1} parent=11 // pred_region
          %s138 = ssub.s32 384, 384
          %139 = vsyncadd [#allocation6], %s138
          %s140 = sshll.u32 [#allocation5], 4
          %s141 = int_to_ptr.vmem [resolvable:$true] %s140
          %146 = dma.hbm_to_vmem [thread:$0]  %s1, 384, %s141, [#allocation6], 64, 64, 4
        $region16: #{tpu_custom_call.1} parent=11 // pred_fallthru
          _
      $region12: #{tpu_custom_call.1} parent=5 // pred_fallthru
        _
      %p147 = scmp.lt.s32.totalorder %s20, 2
      // Predicated region
      $region17: #{tpu_custom_call.1} parent=5 // pred_check
        %p148 = pneg %p147
      $region18: #{tpu_custom_call.1} parent=5 // pred_check_branch
        %150 = sbr.rel (%p148) target = $region20
      $region19: #{tpu_custom_call.1} parent=5 // pred_region
        // Predicated region
        $region21: #{tpu_custom_call.1} parent=19 // pred_check
          %p151 = pneg %p40
        $region22: #{tpu_custom_call.1} parent=19 // pred_check_branch
          %153 = sbr.rel (%p151) target = $region24
        $region23: #{tpu_custom_call.1} parent=19 // pred_region
          %s154 = sand.u32 %s30, 1
          %s155 = scalar_lea.sflag [#allocation3], %s154
          %s156 = sand.u32 %s30, 1
          %s157 = smul.addr %s156, 128
          %s158 = scalar_lea.vmem [#allocation2], %s157
          %s160 = ssub.s32 2048, 2048
          %161 = vsyncadd %s155, %s160
          %s162 = smul.addr %s20, 16
          %s163 = smul.addr %s162, 128
          %s164 = scalar_lea.hbm %s0, %s163
          %s165 = sshll.u32 %s158, 4
          %s166 = int_to_ptr.vmem [resolvable:$true] %s165
          %171 = dma.hbm_to_vmem [thread:$0]  %s164, 2048, %s166, %s155, 128, 128, 8
        $region24: #{tpu_custom_call.1} parent=19 // pred_fallthru
          _
      $region20: #{tpu_custom_call.1} parent=5 // pred_fallthru
        _
      %p172 = scmp.le.s32.totalorder 1, %s20
      %p173 = scmp.lt.s32.totalorder %s20, 3
      %p174 = pnand %p172, %p173
      %p175 = pneg %p174
      // Predicated region
      $region25: #{tpu_custom_call.1} parent=5 // pred_check
        _
      $region26: #{tpu_custom_call.1} parent=5 // pred_check_branch
        %177 = sbr.rel (%p174) target = $region28
      $region27: #{tpu_custom_call.1} parent=5 // pred_region
        %s178 = ssub.s32 %s20, 1
        %s179 = sand.u32 %s33, 1
        %s180 = scalar_lea.sflag [#allocation3], %s179
        %s181 = sand.u32 %s33, 1
        %s182 = smul.addr %s181, 128
        %s183 = scalar_lea.vmem [#allocation2], %s182
        // Predicated region
        $region29: #{tpu_custom_call.1} parent=27 // pred_check
          %p184 = pneg %p46
        $region30: #{tpu_custom_call.1} parent=27 // pred_check_branch
          %186 = sbr.rel (%p184) target = $region32
        $region31: #{tpu_custom_call.1} parent=27 // pred_region
          %187 = dma.done %s180, 2048
        $region32: #{tpu_custom_call.1} parent=27 // pred_fallthru
          _
        // Predicated region
        $region33: #{tpu_custom_call.1} parent=27 // pred_check
          %p188 = pneg %p67
        $region34: #{tpu_custom_call.1} parent=27 // pred_check_branch
          %190 = sbr.rel (%p188) target = $region36
        $region35: #{tpu_custom_call.1} parent=27 // pred_region
          %191 = dma.done [#allocation6], 384
        $region36: #{tpu_custom_call.1} parent=27 // pred_fallthru
          _
        %s192 = sand.u32 %s33, 1
        %s193 = scalar_lea.sflag [#allocation3], %s192
        %s194 = sand.u32 %s33, 1
        %s195 = smul.addr %s194, 128
        %s196 = scalar_lea.vmem [#allocation2], %s195
        %p197 = pneg %p46
        %p198 = pneg %p43
        %p199 = pneg %p67
        %p200 = pneg %p64
        %p201 = pneg %p93
        %p202 = pneg %p90
        %s203 = sand.u32 %s80, 1
        %s204 = scalar_lea.sflag [#allocation4], %s203
        %s205 = sand.u32 %s80, 1
        %s206 = smul.addr %s205, 32
        %s207 = scalar_lea.vmem [#allocation7], %s206
        %p208 = pneg %p119
        %p209 = pneg %p116
        %s210 = sand.u32 %s106, 1
        %s211 = scalar_lea.sflag [#allocation9], %s210
        %s212 = sand.u32 %s106, 1
        %s213 = smul.addr %s212, 2
        %s214 = scalar_lea.vmem [#allocation8], %s213
        %v216 = vld [vmem:[%s183] sm:$0xff]
        %v217 = vld [vmem:[%s183 + $0x10] sm:$0xff]
        %v218 = vld [vmem:[%s183 + $0x20] sm:$0xff]
        %v219 = vld [vmem:[%s183 + $0x30] sm:$0xff]
        %v220 = vld [vmem:[%s183 + $0x40] sm:$0xff]
        %v221 = vld [vmem:[%s183 + $0x50] sm:$0xff]
        %v222 = vld [vmem:[%s183 + $0x60] sm:$0xff]
        %v223 = vld [vmem:[%s183 + $0x70] sm:$0xff]
        %s224 = scalar_lea.vmem %s183, 8 [#allocation2]
        %v225 = vld [vmem:[%s224] sm:$0xff]
        %v226 = vld [vmem:[%s224 + $0x10] sm:$0xff]
        %v227 = vld [vmem:[%s224 + $0x20] sm:$0xff]
        %v228 = vld [vmem:[%s224 + $0x30] sm:$0xff]
        %v229 = vld [vmem:[%s224 + $0x40] sm:$0xff]
        %v230 = vld [vmem:[%s224 + $0x50] sm:$0xff]
        %v231 = vld [vmem:[%s224 + $0x60] sm:$0xff]
        %v232 = vld [vmem:[%s224 + $0x70] sm:$0xff]
        %v233 = vmax.f32 %v216, %v225
        %v234 = vmax.f32 %v217, %v226
        %v235 = vmax.f32 %v218, %v227
        %v236 = vmax.f32 %v219, %v228
        %v237 = vmax.f32 %v220, %v229
        %v238 = vmax.f32 %v221, %v230
        %v239 = vmax.f32 %v222, %v231
        %v240 = vmax.f32 %v223, %v232
        %249 = vrot.lane.b32.xlu0 %v233, 124
        %v250 = vpop.permute.xlu0 %249
        %251 = vrot.lane.b32.xlu0 %v234, 124
        %v252 = vpop.permute.xlu0 %251
        %253 = vrot.lane.b32.xlu0 %v235, 124
        %v254 = vpop.permute.xlu0 %253
        %255 = vrot.lane.b32.xlu0 %v236, 124
        %v256 = vpop.permute.xlu0 %255
        %257 = vrot.lane.b32.xlu0 %v237, 124
        %v258 = vpop.permute.xlu0 %257
        %259 = vrot.lane.b32.xlu0 %v238, 124
        %v260 = vpop.permute.xlu0 %259
        %261 = vrot.lane.b32.xlu0 %v239, 124
        %v262 = vpop.permute.xlu0 %261
        %263 = vrot.lane.b32.xlu0 %v240, 124
        %v264 = vpop.permute.xlu0 %263
        %v273 = vmax.f32 %v233, %v250
        %v274 = vmax.f32 %v234, %v252
        %v275 = vmax.f32 %v235, %v254
        %v276 = vmax.f32 %v236, %v256
        %v277 = vmax.f32 %v237, %v258
        %v278 = vmax.f32 %v238, %v260
        %v279 = vmax.f32 %v239, %v262
        %v280 = vmax.f32 %v240, %v264
        %v281 = vpack.c.bf16 %v273, %v273
        %v282 = vpack.c.bf16 %v274, %v274
        %v283 = vpack.c.bf16 %v275, %v275
        %v284 = vpack.c.bf16 %v276, %v276
        %v285 = vpack.c.bf16 %v277, %v277
        %v286 = vpack.c.bf16 %v278, %v278
        %v287 = vpack.c.bf16 %v279, %v279
        %v288 = vpack.c.bf16 %v280, %v280
        %v290 = vshrl.u32 0, 16
        %v292 = vrot.slane %v290, 7
        %v293 = vshll.u32 0, 16
        %v295 = vor.u32 %v292, %v293
        %v297 = vshrl.u32 %v281, 16
        %v299 = vrot.slane %v297, 7
        %v300 = vshll.u32 %v281, 16
        %v302 = vor.u32 %v299, %v300
        %v304 = vshrl.u32 %v282, 16
        %v306 = vrot.slane %v304, 7
        %v307 = vshll.u32 %v282, 16
        %v309 = vor.u32 %v306, %v307
        %v311 = vshrl.u32 %v283, 16
        %v313 = vrot.slane %v311, 7
        %v314 = vshll.u32 %v283, 16
        %v316 = vor.u32 %v313, %v314
        %v318 = vshrl.u32 %v284, 16
        %v320 = vrot.slane %v318, 7
        %v321 = vshll.u32 %v284, 16
        %v323 = vor.u32 %v320, %v321
        %v325 = vshrl.u32 %v285, 16
        %v327 = vrot.slane %v325, 7
        %v328 = vshll.u32 %v285, 16
        %v330 = vor.u32 %v327, %v328
        %v332 = vshrl.u32 %v286, 16
        %v334 = vrot.slane %v332, 7
        %v335 = vshll.u32 %v286, 16
        %v337 = vor.u32 %v334, %v335
        %v339 = vshrl.u32 %v287, 16
        %v341 = vrot.slane %v339, 7
        %v342 = vshll.u32 %v287, 16
        %v344 = vor.u32 %v341, %v342
        %v346 = vshrl.u32 %v288, 16
        %v348 = vrot.slane %v346, 7
        %v349 = vshll.u32 %v288, 16
        %v351 = vor.u32 %v348, %v349
        %vm361 = vcmask 1040384
        %vm362 = vsmask.f32 256
        %vm363 = vmand %vm361, %vm362
        %v364 = vsel %vm363, 0, %v295
        %v365 = vsel %vm363, 0, %v302
        %v366 = vsel %vm363, 0, %v309
        %v367 = vsel %vm363, 0, %v316
        %v368 = vsel %vm363, 0, %v323
        %v369 = vsel %vm363, 0, %v330
        %v370 = vsel %vm363, 0, %v337
        %v371 = vsel %vm363, 0, %v344
        %v372 = vsel %vm363, 0, %v351
        %v373 = vrot.slane %v293, 1
        %v374 = vor.u32 %v290, %v373
        %v375 = vrot.slane %v300, 1
        %v376 = vor.u32 %v297, %v375
        %v377 = vrot.slane %v307, 1
        %v378 = vor.u32 %v304, %v377
        %v379 = vrot.slane %v314, 1
        %v380 = vor.u32 %v311, %v379
        %v381 = vrot.slane %v321, 1
        %v382 = vor.u32 %v318, %v381
        %v383 = vrot.slane %v328, 1
        %v384 = vor.u32 %v325, %v383
        %v385 = vrot.slane %v335, 1
        %v386 = vor.u32 %v332, %v385
        %v387 = vrot.slane %v342, 1
        %v388 = vor.u32 %v339, %v387
        %v389 = vrot.slane %v349, 1
        %v390 = vor.u32 %v346, %v389
        %vm400 = vcmask 1043456
        %vm401 = vsmask.f32 3328
        %vm402 = vmand %vm400, %vm401
        %v403 = vsel %vm402, %v374, 0
        %v404 = vsel %vm402, %v376, 0
        %v405 = vsel %vm402, %v378, 0
        %v406 = vsel %vm402, %v380, 0
        %v407 = vsel %vm402, %v382, 0
        %v408 = vsel %vm402, %v384, 0
        %v409 = vsel %vm402, %v386, 0
        %v410 = vsel %vm402, %v388, 0
        %v411 = vsel %vm402, %v390, 0
        %421 = vrot.lane.b32.xlu0 0, 4
        %v422 = vpop.permute.xlu0 %421
        %423 = vrot.lane.b32.xlu0 %v281, 4
        %v424 = vpop.permute.xlu0 %423
        %425 = vrot.lane.b32.xlu0 %v282, 4
        %v426 = vpop.permute.xlu0 %425
        %427 = vrot.lane.b32.xlu0 %v283, 4
        %v428 = vpop.permute.xlu0 %427
        %429 = vrot.lane.b32.xlu0 %v284, 4
        %v430 = vpop.permute.xlu0 %429
        %431 = vrot.lane.b32.xlu0 %v285, 4
        %v432 = vpop.permute.xlu0 %431
        %433 = vrot.lane.b32.xlu0 %v286, 4
        %v434 = vpop.permute.xlu0 %433
        %435 = vrot.lane.b32.xlu0 %v287, 4
        %v436 = vpop.permute.xlu0 %435
        %437 = vrot.lane.b32.xlu0 %v288, 4
        %v438 = vpop.permute.xlu0 %437
        %448 = vrot.lane.b32.xlu0 %v403, 8
        %v449 = vpop.permute.xlu0 %448
        %450 = vrot.lane.b32.xlu0 %v404, 8
        %v451 = vpop.permute.xlu0 %450
        %452 = vrot.lane.b32.xlu0 %v405, 8
        %v453 = vpop.permute.xlu0 %452
        %454 = vrot.lane.b32.xlu0 %v406, 8
        %v455 = vpop.permute.xlu0 %454
        %456 = vrot.lane.b32.xlu0 %v407, 8
        %v457 = vpop.permute.xlu0 %456
        %458 = vrot.lane.b32.xlu0 %v408, 8
        %v459 = vpop.permute.xlu0 %458
        %460 = vrot.lane.b32.xlu0 %v409, 8
        %v461 = vpop.permute.xlu0 %460
        %462 = vrot.lane.b32.xlu0 %v410, 8
        %v463 = vpop.permute.xlu0 %462
        %464 = vrot.lane.b32.xlu0 %v411, 8
        %v465 = vpop.permute.xlu0 %464
        %vm466 = vcmask 31744
        %v469 = vsel %vm466, %v364, %v422
        %v472 = vsel %vm466, %v365, %v424
        %v475 = vsel %vm466, %v366, %v426
        %v478 = vsel %vm466, %v367, %v428
        %v481 = vsel %vm466, %v368, %v430
        %v484 = vsel %vm466, %v369, %v432
        %v487 = vsel %vm466, %v370, %v434
        %v490 = vsel %vm466, %v371, %v436
        %v493 = vsel %vm466, %v372, %v438
        %vm494 = vcmask 64512
        %v496 = vsel %vm494, %v469, %v449
        %v498 = vsel %vm494, %v472, %v451
        %v500 = vsel %vm494, %v475, %v453
        %v502 = vsel %vm494, %v478, %v455
        %v504 = vsel %vm494, %v481, %v457
        %v506 = vsel %vm494, %v484, %v459
        %v508 = vsel %vm494, %v487, %v461
        %v510 = vsel %vm494, %v490, %v463
        %v512 = vsel %vm494, %v493, %v465
        %v513 = vld [vmem:[#allocation5] sm:$0xf]
        %v514 = vld [vmem:[#allocation5 + $0x4] sm:$0x3]
        %s515 = scalar_lea.vmem [#allocation5], 8
        %v516 = vld [vmem:[%s515] sm:$0xf]
        %v517 = vld [vmem:[%s515 + $0x4] sm:$0x3]
        %v526 = vunpack.c.l.b16 %v498
        %v527 = vunpack.c.l.b16 %v500
        %v528 = vunpack.c.l.b16 %v502
        %v529 = vunpack.c.l.b16 %v504
        %v530 = vunpack.c.l.b16 %v506
        %v531 = vunpack.c.l.b16 %v508
        %v532 = vunpack.c.l.b16 %v510
        %v533 = vunpack.c.l.b16 %v512
        %v534 = vpack.c.b16 %v527, %v526
        %v535 = vpack.c.b16 %v529, %v528
        %v536 = vpack.c.b16 %v531, %v530
        %v537 = vpack.c.b16 %v533, %v532
        %v540 = vunpack.c.l.b16 %v516
        %v541 = vunpack.c.l.b16 %v517
        %v542 = vpack.c.b16 %v541, %v540
        %vm543 = vcmask 97280
        %v545 = vsel %vm543, %v534, 0
        %v548 = vsel %vm543, %v535, 0
        %v551 = vsel %vm543, %v536, 0
        %v554 = vsel %vm543, %v537, 0
        %vm556 = vcmask 1045504
        %v558 = vsel %vm556, %v542, 0
        %560 = vmatprep.subr.bf16.mxu0 0
        %561 = vmatpush1.bf16.msra.mxu0 0
        %562 = vmatprep.subr.bf16.mxu0 0
        %563 = vmatpush1.bf16.msra.mxu0 0
        %564 = vmatprep.subr.bf16.mxu0 0
        %565 = vmatpush1.bf16.msra.mxu0 0
        %566 = vmatprep.subr.bf16.mxu0 0
        %567 = vmatpush1.bf16.msra.mxu0 0
        %568 = vmatprep.subr.bf16.mxu0 0
        %569 = vmatpush1.bf16.msra.mxu0 0
        %570 = vmatprep.subr.bf16.mxu0 0
        %571 = vmatpush1.bf16.msra.mxu0 0
        %572 = vmatprep.subr.bf16.mxu0 0
        %573 = vmatpush1.bf16.msra.mxu0 0
        %574 = vmatprep.subr.bf16.mxu0 0
        %575 = vmatpush1.bf16.msra.mxu0 %v558
        %576 = vmatprep.subr.bf16.mxu0 0
        %577 = vmatpush2.bf16.msra.mxu0 0
        %578 = vmatprep.subr.bf16.mxu0 0
        %579 = vmatpush2.bf16.msra.mxu0 0
        %580 = vmatprep.subr.bf16.mxu0 0
        %581 = vmatpush2.bf16.msra.mxu0 0
        %582 = vmatprep.subr.bf16.mxu0 0
        %583 = vmatpush2.bf16.msra.mxu0 0
        %584 = vmatprep.subr.bf16.mxu0 0
        %585 = vmatpush2.bf16.msra.mxu0 0
        %586 = vmatprep.subr.bf16.mxu0 0
        %587 = vmatpush2.bf16.msra.mxu0 0
        %588 = vmatprep.subr.bf16.mxu0 0
        %589 = vmatpush2.bf16.msra.mxu0 0
        %590 = vmatprep.subr.bf16.mxu0 0
        %591 = vmatpush2.bf16.msra.mxu0 0
        %592 = vmatprep.mubr.bf16.mxu0 0
        %593 = vmatmul.mubr.bf16.gmra.mxu0 %v545
        %v594 = vpop.f32.mrf.mxu0
        %v595 = vadd.f32 0.0, %v594
        %v596 = vpop.f32.mrf.mxu0
        %v597 = vpop.f32.mrf.mxu0
        %v598 = vadd.f32 0.0, %v597
        %v599 = vpop.f32.mrf.mxu0
        %600 = vmatprep.mubr.bf16.mxu0 0
        %601 = vmatmul.mubr.bf16.gmra.mxu0 %v548
        %v602 = vpop.f32.mrf.mxu0
        %v603 = vadd.f32 0.0, %v602
        %v604 = vpop.f32.mrf.mxu0
        %v605 = vpop.f32.mrf.mxu0
        %v606 = vadd.f32 0.0, %v605
        %v607 = vpop.f32.mrf.mxu0
        %608 = vmatprep.mubr.bf16.mxu0 0
        %609 = vmatmul.mubr.bf16.gmra.mxu0 %v551
        %v610 = vpop.f32.mrf.mxu0
        %v611 = vadd.f32 0.0, %v610
        %v612 = vpop.f32.mrf.mxu0
        %v613 = vpop.f32.mrf.mxu0
        %v614 = vadd.f32 0.0, %v613
        %v615 = vpop.f32.mrf.mxu0
        %616 = vmatprep.mubr.bf16.mxu0 0
        %617 = vmatmul.mubr.bf16.gmra.mxu0 %v554
        %v618 = vpop.f32.mrf.mxu0
        %v619 = vadd.f32 0.0, %v618
        %v620 = vpop.f32.mrf.mxu0
        %v621 = vpop.f32.mrf.mxu0
        %v622 = vadd.f32 0.0, %v621
        %v623 = vpop.f32.mrf.mxu0
        %624 = vdwg.mxu0
        %v626 = vunpack.c.l.b16 %v496
        %v627 = vpack.c.b16 %v526, %v626
        %v628 = vpack.c.b16 %v528, %v527
        %v629 = vpack.c.b16 %v530, %v529
        %v630 = vpack.c.b16 %v532, %v531
        %v633 = vunpack.c.l.b16 %v513
        %v634 = vunpack.c.l.b16 %v514
        %v635 = vpack.c.b16 %v634, %v633
        %v637 = vsel %vm543, %v627, 0
        %v640 = vsel %vm543, %v628, 0
        %v643 = vsel %vm543, %v629, 0
        %v646 = vsel %vm543, %v630, 0
        %v649 = vsel %vm556, %v635, 0
        %651 = vmatprep.subr.bf16.mxu0 0
        %652 = vmatpush1.bf16.msra.mxu0 0
        %653 = vmatprep.subr.bf16.mxu0 0
        %654 = vmatpush1.bf16.msra.mxu0 0
        %655 = vmatprep.subr.bf16.mxu0 0
        %656 = vmatpush1.bf16.msra.mxu0 0
        %657 = vmatprep.subr.bf16.mxu0 0
        %658 = vmatpush1.bf16.msra.mxu0 0
        %659 = vmatprep.subr.bf16.mxu0 0
        %660 = vmatpush1.bf16.msra.mxu0 0
        %661 = vmatprep.subr.bf16.mxu0 0
        %662 = vmatpush1.bf16.msra.mxu0 0
        %663 = vmatprep.subr.bf16.mxu0 0
        %664 = vmatpush1.bf16.msra.mxu0 0
        %665 = vmatprep.subr.bf16.mxu0 0
        %666 = vmatpush1.bf16.msra.mxu0 %v649
        %667 = vmatprep.subr.bf16.mxu0 0
        %668 = vmatpush2.bf16.msra.mxu0 0
        %669 = vmatprep.subr.bf16.mxu0 0
        %670 = vmatpush2.bf16.msra.mxu0 0
        %671 = vmatprep.subr.bf16.mxu0 0
        %672 = vmatpush2.bf16.msra.mxu0 0
        %673 = vmatprep.subr.bf16.mxu0 0
        %674 = vmatpush2.bf16.msra.mxu0 0
        %675 = vmatprep.subr.bf16.mxu0 0
        %676 = vmatpush2.bf16.msra.mxu0 0
        %677 = vmatprep.subr.bf16.mxu0 0
        %678 = vmatpush2.bf16.msra.mxu0 0
        %679 = vmatprep.subr.bf16.mxu0 0
        %680 = vmatpush2.bf16.msra.mxu0 0
        %681 = vmatprep.subr.bf16.mxu0 0
        %682 = vmatpush2.bf16.msra.mxu0 0
        %683 = vmatprep.mubr.bf16.mxu0 0
        %684 = vmatmul.mubr.bf16.gmra.mxu0 %v637
        %v685 = vpop.f32.mrf.mxu0
        %v686 = vadd.f32 %v595, %v685
        %v687 = vpop.f32.mrf.mxu0
        %v688 = vpop.f32.mrf.mxu0
        %v689 = vadd.f32 %v598, %v688
        %v690 = vpop.f32.mrf.mxu0
        %691 = vmatprep.mubr.bf16.mxu0 0
        %692 = vmatmul.mubr.bf16.gmra.mxu0 %v640
        %v693 = vpop.f32.mrf.mxu0
        %v694 = vadd.f32 %v603, %v693
        %v695 = vpop.f32.mrf.mxu0
        %v696 = vpop.f32.mrf.mxu0
        %v697 = vadd.f32 %v606, %v696
        %v698 = vpop.f32.mrf.mxu0
        %699 = vmatprep.mubr.bf16.mxu0 0
        %700 = vmatmul.mubr.bf16.gmra.mxu0 %v643
        %v701 = vpop.f32.mrf.mxu0
        %v702 = vadd.f32 %v611, %v701
        %v703 = vpop.f32.mrf.mxu0
        %v704 = vpop.f32.mrf.mxu0
        %v705 = vadd.f32 %v614, %v704
        %v706 = vpop.f32.mrf.mxu0
        %707 = vmatprep.mubr.bf16.mxu0 0
        %708 = vmatmul.mubr.bf16.gmra.mxu0 %v646
        %v709 = vpop.f32.mrf.mxu0
        %v710 = vadd.f32 %v619, %v709
        %v711 = vpop.f32.mrf.mxu0
        %v712 = vpop.f32.mrf.mxu0
        %v713 = vadd.f32 %v622, %v712
        %v714 = vpop.f32.mrf.mxu0
        %715 = vdwg.mxu0
        %s716 = scalar_lea.vmem [#allocation5], 16
        %v717 = vld [vmem:[%s716] sm:$0xf]
        %v718 = vld [vmem:[%s716 + $0x4] sm:$0x3]
        %v719 = vpack.c.b16 %v626, %v533
        %v722 = vunpack.c.l.b16 %v717
        %v723 = vunpack.c.l.b16 %v718
        %v724 = vpack.c.b16 %v723, %v722
        %v726 = vsel %vm543, %v719, 0
        %v729 = vsel %vm556, %v724, 0
        %731 = vmatprep.subr.bf16.mxu0 0
        %732 = vmatpush1.bf16.msra.mxu0 0
        %733 = vmatprep.subr.bf16.mxu0 0
        %734 = vmatpush1.bf16.msra.mxu0 0
        %735 = vmatprep.subr.bf16.mxu0 0
        %736 = vmatpush1.bf16.msra.mxu0 0
        %737 = vmatprep.subr.bf16.mxu0 0
        %738 = vmatpush1.bf16.msra.mxu0 0
        %739 = vmatprep.subr.bf16.mxu0 0
        %740 = vmatpush1.bf16.msra.mxu0 0
        %741 = vmatprep.subr.bf16.mxu0 0
        %742 = vmatpush1.bf16.msra.mxu0 0
        %743 = vmatprep.subr.bf16.mxu0 0
        %744 = vmatpush1.bf16.msra.mxu0 0
        %745 = vmatprep.subr.bf16.mxu0 0
        %746 = vmatpush1.bf16.msra.mxu0 %v729
        %747 = vmatprep.subr.bf16.mxu0 0
        %748 = vmatpush2.bf16.msra.mxu0 0
        %749 = vmatprep.subr.bf16.mxu0 0
        %750 = vmatpush2.bf16.msra.mxu0 0
        %751 = vmatprep.subr.bf16.mxu0 0
        %752 = vmatpush2.bf16.msra.mxu0 0
        %753 = vmatprep.subr.bf16.mxu0 0
        %754 = vmatpush2.bf16.msra.mxu0 0
        %755 = vmatprep.subr.bf16.mxu0 0
        %756 = vmatpush2.bf16.msra.mxu0 0
        %757 = vmatprep.subr.bf16.mxu0 0
        %758 = vmatpush2.bf16.msra.mxu0 0
        %759 = vmatprep.subr.bf16.mxu0 0
        %760 = vmatpush2.bf16.msra.mxu0 0
        %761 = vmatprep.subr.bf16.mxu0 0
        %762 = vmatpush2.bf16.msra.mxu0 0
        %763 = vmatprep.mubr.bf16.mxu0 0
        %764 = vmatmul.mubr.bf16.gmra.mxu0 %v640
        %v765 = vpop.f32.mrf.mxu0
        %v766 = vadd.f32 0.0, %v765
        %v767 = vpop.f32.mrf.mxu0
        %v768 = vpop.f32.mrf.mxu0
        %v769 = vadd.f32 0.0, %v768
        %v770 = vpop.f32.mrf.mxu0
        %771 = vmatprep.mubr.bf16.mxu0 0
        %772 = vmatmul.mubr.bf16.gmra.mxu0 %v643
        %v773 = vpop.f32.mrf.mxu0
        %v774 = vadd.f32 0.0, %v773
        %v775 = vpop.f32.mrf.mxu0
        %v776 = vpop.f32.mrf.mxu0
        %v777 = vadd.f32 0.0, %v776
        %v778 = vpop.f32.mrf.mxu0
        %779 = vmatprep.mubr.bf16.mxu0 0
        %780 = vmatmul.mubr.bf16.gmra.mxu0 %v646
        %v781 = vpop.f32.mrf.mxu0
        %v782 = vadd.f32 0.0, %v781
        %v783 = vpop.f32.mrf.mxu0
        %v784 = vpop.f32.mrf.mxu0
        %v785 = vadd.f32 0.0, %v784
        %v786 = vpop.f32.mrf.mxu0
        %787 = vmatprep.mubr.bf16.mxu0 0
        %788 = vmatmul.mubr.bf16.gmra.mxu0 %v726
        %v789 = vpop.f32.mrf.mxu0
        %v790 = vadd.f32 0.0, %v789
        %v791 = vpop.f32.mrf.mxu0
        %v792 = vpop.f32.mrf.mxu0
        %v793 = vadd.f32 0.0, %v792
        %v794 = vpop.f32.mrf.mxu0
        %795 = vdwg.mxu0
        %v796 = vadd.f32 %v686, %v766
        %v797 = vadd.f32 %v689, %v769
        %v798 = vadd.f32 %v694, %v774
        %v799 = vadd.f32 %v697, %v777
        %v800 = vadd.f32 %v702, %v782
        %v801 = vadd.f32 %v705, %v785
        %v802 = vadd.f32 %v710, %v790
        %v803 = vadd.f32 %v713, %v793
        %v804 = vpack.c.bf16 %v796, %v796
        %v805 = vpack.c.bf16 %v797, %v797
        %v806 = vpack.c.bf16 %v798, %v798
        %v807 = vpack.c.bf16 %v799, %v799
        %v808 = vpack.c.bf16 %v800, %v800
        %v809 = vpack.c.bf16 %v801, %v801
        %v810 = vpack.c.bf16 %v802, %v802
        %v811 = vpack.c.bf16 %v803, %v803
        %812 = vst [vmem:[%s207] sm:$0xf] %v804
        %813 = vst [vmem:[%s207 + $0x4] sm:$0xf] %v805
        %814 = vst [vmem:[%s207 + $0x8] sm:$0xf] %v806
        %815 = vst [vmem:[%s207 + $0xc] sm:$0xf] %v807
        %816 = vst [vmem:[%s207 + $0x10] sm:$0xf] %v808
        %817 = vst [vmem:[%s207 + $0x14] sm:$0xf] %v809
        %818 = vst [vmem:[%s207 + $0x18] sm:$0xf] %v810
        %819 = vst [vmem:[%s207 + $0x1c] sm:$0xf] %v811
        %v820 = vadd.f32 %v796, %v797
        %v821 = vadd.f32 %v820, %v798
        %v822 = vadd.f32 %v821, %v799
        %v823 = vadd.f32 %v822, %v800
        %v824 = vadd.f32 %v823, %v801
        %v825 = vadd.f32 %v824, %v802
        %v826 = vadd.f32 %v825, %v803
        %v827 = vrot.slane %v826, 4
        %v828 = vadd.f32 %v826, %v827
        %v829 = vrot.slane %v828, 2
        %v830 = vadd.f32 %v828, %v829
        %v831 = vrot.slane %v830, 1
        %v832 = vadd.f32 %v830, %v831
        %v833 = vmul.f32 %v796, %v796
        %v834 = vmul.f32 %v797, %v797
        %v835 = vmul.f32 %v798, %v798
        %v836 = vmul.f32 %v799, %v799
        %v837 = vmul.f32 %v800, %v800
        %v838 = vmul.f32 %v801, %v801
        %v839 = vmul.f32 %v802, %v802
        %v840 = vmul.f32 %v803, %v803
        %v841 = vadd.f32 %v833, %v834
        %v842 = vadd.f32 %v841, %v835
        %v843 = vadd.f32 %v842, %v836
        %v844 = vadd.f32 %v843, %v837
        %v845 = vadd.f32 %v844, %v838
        %v846 = vadd.f32 %v845, %v839
        %v847 = vadd.f32 %v846, %v840
        %v848 = vrot.slane %v847, 4
        %v849 = vadd.f32 %v847, %v848
        %v850 = vrot.slane %v849, 2
        %v851 = vadd.f32 %v849, %v850
        %v852 = vrot.slane %v851, 1
        %v853 = vadd.f32 %v851, %v852
        %vm854 = vcmask 1040384
        %v855 = vsel %vm854, %v832, %v853
        %856 = vst [vmem:[%s214] sm:$0x3] %v855
        %s857 = sand.u32 %s80, 1
        %s858 = scalar_lea.sflag [#allocation4], %s857
        %s859 = sand.u32 %s80, 1
        %s860 = smul.addr %s859, 32
        %s861 = scalar_lea.vmem [#allocation7], %s860
        %s862 = sand.u32 %s106, 1
        %s863 = scalar_lea.sflag [#allocation9], %s862
        %s864 = sand.u32 %s106, 1
        %s865 = smul.addr %s864, 2
        %s866 = scalar_lea.vmem [#allocation8], %s865
        // Predicated region
        $region37: #{tpu_custom_call.1} parent=27 // pred_check
          %p867 = pneg %p90
        $region38: #{tpu_custom_call.1} parent=27 // pred_check_branch
          %869 = sbr.rel (%p867) target = $region40
        $region39: #{tpu_custom_call.1} parent=27 // pred_region
          %s871 = ssub.s32 512, 512
          %872 = vsyncadd %s858, %s871
          %s873 = smul.addr %s25, 8
          %s874 = smul.addr %s873, 64
          %s875 = scalar_lea.hbm %s2, %s874
          %s876 = sshll.u32 %s861, 4
          %s877 = int_to_ptr.vmem [resolvable:$true] %s876
          %882 = dma.vmem_to_hbm [thread:$0]  %s877, 512, %s875, %s858, 64, 64, 4
        $region40: #{tpu_custom_call.1} parent=27 // pred_fallthru
          _
        // Predicated region
        $region41: #{tpu_custom_call.1} parent=27 // pred_check
          %p883 = pneg %p116
        $region42: #{tpu_custom_call.1} parent=27 // pred_check_branch
          %885 = sbr.rel (%p883) target = $region44
        $region43: #{tpu_custom_call.1} parent=27 // pred_region
          %s887 = ssub.s32 32, 32
          %888 = vsyncadd %s863, %s887
          %s889 = smul.addr %s25, 32
          %s890 = scalar_lea.hbm %s3, %s889
          %s892 = sshll.u32 %s866, 4
          %s893 = int_to_ptr.vmem [resolvable:$true] %s892
          %895 = dma.vmem_to_hbm [thread:$0]  %s893, 32, %s890, %s863
        $region44: #{tpu_custom_call.1} parent=27 // pred_fallthru
          _
      $region28: #{tpu_custom_call.1} parent=5 // pred_fallthru
        _
      %p896 = scmp.le.s32.totalorder 2, %s20
      // Predicated region
      $region45: #{tpu_custom_call.1} parent=5 // pred_check
        %p897 = pneg %p896
      $region46: #{tpu_custom_call.1} parent=5 // pred_check_branch
        %899 = sbr.rel (%p897) target = $region48
      $region47: #{tpu_custom_call.1} parent=5 // pred_region
        %s900 = ssub.s32 %s20, 2
        // Predicated region
        $region49: #{tpu_custom_call.1} parent=47 // pred_check
          %p901 = pneg %p96
        $region50: #{tpu_custom_call.1} parent=47 // pred_check_branch
          %903 = sbr.rel (%p901) target = $region52
        $region51: #{tpu_custom_call.1} parent=47 // pred_region
          %s904 = sand.u32 %s81, 1
          %s905 = scalar_lea.sflag [#allocation4], %s904
          %s906 = sand.u32 %s81, 1
          %s907 = smul.addr %s906, 32
          %s908 = scalar_lea.vmem [#allocation7], %s907
          %909 = dma.done %s905, 512
        $region52: #{tpu_custom_call.1} parent=47 // pred_fallthru
          _
        // Predicated region
        $region53: #{tpu_custom_call.1} parent=47 // pred_check
          %p910 = pneg %p122
        $region54: #{tpu_custom_call.1} parent=47 // pred_check_branch
          %912 = sbr.rel (%p910) target = $region56
        $region55: #{tpu_custom_call.1} parent=47 // pred_region
          %s913 = sand.u32 %s107, 1
          %s914 = scalar_lea.sflag [#allocation9], %s913
          %s915 = sand.u32 %s107, 1
          %s916 = smul.addr %s915, 2
          %s917 = scalar_lea.vmem [#allocation8], %s916
          %918 = dma.done %s914, 32
        $region56: #{tpu_custom_call.1} parent=47 // pred_fallthru
          _
      $region48: #{tpu_custom_call.1} parent=5 // pred_fallthru
        _
    $region6: #{tpu_custom_call.1} parent=1 // loop_footer
      %s24 = sadd.s32 1, %s20
    $region7: #{tpu_custom_call.1} parent=1 // loop_footer_branch
      %19 = sbr.rel target = $region3
    $region8: #{tpu_custom_call.1} parent=1 // loop_exit
      _
    %919 = vsyncpa [#allocation3], 1
    %s920 = scalar_lea.sflag [#allocation3], 1
    %921 = vsyncpa %s920, 1
    %922 = vsyncpa [#allocation6], 1
    %923 = vsyncpa [#allocation4], 1
    %s924 = scalar_lea.sflag [#allocation4], 1
    %925 = vsyncpa %s924, 1
    %926 = vsyncpa [#allocation9], 1
    %s927 = scalar_lea.sflag [#allocation9], 1
    %928 = vsyncpa %s927, 1

</llo_original>
